<compile_context>
chip_gen: v7x
topology: tpu7x:2x2x1
jax: 0.10.0
libtpu: 0.0.40
codegen_flags: <defaults>
</compile_context>

<pallas_src>
import math

import jax
import jax.numpy as jnp
from jax import lax
from jax.experimental import pallas as pl
from jax.experimental.pallas import tpu as pltpu


# ---------------------------------------------------------------------------
# Fused Pallas kernels
# ---------------------------------------------------------------------------

def _weighted_adj(w_ref, a_ref, c):
    """sum_e w[c, e] * A[e]  (E is a small static int -> unrolled VPU adds)."""
    E = a_ref.shape[0]
    acc = w_ref[c, 0] * a_ref[0]
    for e in range(1, E):
        acc = acc + w_ref[c, e] * a_ref[e]
    return acc


def _norm_no_transpose(H, add):
    """Transpose-free equivalent of torch GTN.norm(H, add).

    norm(H) = (D^-1 @ (H^T ⊙ (1-I) [+ I]))^T  ==  M * deg_inv   (column scaling)
    with M = H ⊙ (1-I) [+ I] and deg = column sums of M (deg==0 -> inverse 0).
    """
    N = H.shape[0]
    eye = jnp.eye(N, dtype=H.dtype)
    M = H * (1.0 - eye)
    if add:
        M = M + eye
    deg = jnp.sum(M, axis=0, keepdims=True)            # (1, N) column sums
    deg_inv = jnp.where(deg == 0.0, 0.0, 1.0 / deg)
    return M * deg_inv                                  # scale columns


def layer_first_kernel(w1_ref, w2_ref, a_ref, o_ref):
    """First GTLayer, one channel per grid step:
         H_c = (sum_e w1[c,e] A_e) @ (sum_e w2[c,e] A_e)
    w1/w2: SMEM (C,E); a_ref: VMEM (E,N,N) resident block; o_ref: (1,N,N).
    """
    c = pl.program_id(0)
    a = _weighted_adj(w1_ref, a_ref, c)
    b = _weighted_adj(w2_ref, a_ref, c)
    o_ref[0] = jnp.dot(a, b, preferred_element_type=jnp.float32)


def layer_next_kernel(w1_ref, a_ref, h_ref, o_ref):
    """Subsequent GTLayer, one channel per grid step:
         H_c = norm(H_prev_c, add=False) @ (sum_e w1[c,e] A_e)
    """
    c = pl.program_id(0)
    Hn = _norm_no_transpose(h_ref[0], add=False)
    a = _weighted_adj(w1_ref, a_ref, c)
    o_ref[0] = jnp.dot(Hn, a, preferred_element_type=jnp.float32)


def gcn_linear1_kernel(h_ref, x_ref, w_ref, w1t_ref, b1_ref, o_ref):
    """Fused tail: XW (once) + per-channel gcn_conv + ReLU + (concat ∘ linear1) + ReLU.

      XW   = X @ weight                                  (channel invariant)
      y_c  = relu(norm(H_c, add=True)^T @ XW)            (MXU absorbs transpose)
      out  = relu(sum_c y_c @ W1^T[c*w_out:(c+1)*w_out]  + b1)
           == relu(linear1(concat_c y_c))                (no explicit concat)
    """
    C = h_ref.shape[0]
    w_out = w_ref.shape[1]
    xw = jnp.dot(x_ref[...], w_ref[...], preferred_element_type=jnp.float32)
    acc = jnp.zeros(o_ref.shape, jnp.float32)
    for c in range(C):
        Hn = _norm_no_transpose(h_ref[c], add=True)
        # Hn^T @ XW via dot_general contracting axis 0 of both operands.
        y = lax.dot_general(Hn, xw, (((0,), (0,)), ((), ())),
                            preferred_element_type=jnp.float32)
        y = jnp.maximum(y, 0.0)
        w1_c = w1t_ref[c * w_out:(c + 1) * w_out, :]     # static slice, no copy
        acc = acc + jnp.dot(y, w1_c, preferred_element_type=jnp.float32)
    o_ref[...] = jnp.maximum(acc + b1_ref[...], 0.0)


# ---------------------------------------------------------------------------
# pallas_call wrappers
# ---------------------------------------------------------------------------

def gt_layer_first(A, w1s, w2s):
    """A: (E,N,N), w1s/w2s: (C,E) softmaxed -> H: (C,N,N)."""
    E, N, _ = A.shape
    C = w1s.shape[0]
    return pl.pallas_call(
        layer_first_kernel,
        out_shape=jax.ShapeDtypeStruct((C, N, N), jnp.float32),
        grid=(C,),
        in_specs=[
            pl.BlockSpec(memory_space=pltpu.MemorySpace.SMEM),
            pl.BlockSpec(memory_space=pltpu.MemorySpace.SMEM),
            pl.BlockSpec((E, N, N), lambda c: (0, 0, 0)),
        ],
        out_specs=pl.BlockSpec((1, N, N), lambda c: (c, 0, 0)),
        compiler_params=pltpu.CompilerParams(dimension_semantics=("parallel",)),
    )(w1s, w2s, A)


def gt_layer_next(A, H, w1s):
    """A: (E,N,N), H: (C,N,N) previous layer, w1s: (C,E) -> new H: (C,N,N)."""
    E, N, _ = A.shape
    C = w1s.shape[0]
    return pl.pallas_call(
        layer_next_kernel,
        out_shape=jax.ShapeDtypeStruct((C, N, N), jnp.float32),
        grid=(C,),
        in_specs=[
            pl.BlockSpec(memory_space=pltpu.MemorySpace.SMEM),
            pl.BlockSpec((E, N, N), lambda c: (0, 0, 0)),
            pl.BlockSpec((1, N, N), lambda c: (c, 0, 0)),
        ],
        out_specs=pl.BlockSpec((1, N, N), lambda c: (c, 0, 0)),
        compiler_params=pltpu.CompilerParams(dimension_semantics=("parallel",)),
    )(w1s, A, H)


def gcn_linear1(H, X, weight, lin1_wT, lin1_b_row):
    """H: (C,N,N), X: (N,w_in), weight: (w_in,w_out),
       lin1_wT: (C*w_out, w_out), lin1_b_row: (1, w_out) -> (N, w_out)."""
    N = X.shape[0]
    out_dim = lin1_b_row.shape[1]
    return pl.pallas_call(
        gcn_linear1_kernel,
        out_shape=jax.ShapeDtypeStruct((N, out_dim), jnp.float32),
        in_specs=[pl.BlockSpec(memory_space=pltpu.MemorySpace.VMEM)] * 5,
        out_specs=pl.BlockSpec(memory_space=pltpu.MemorySpace.VMEM),
    )(H, X, weight, lin1_wT, lin1_b_row)


# ---------------------------------------------------------------------------
# Parameter construction (mirrors module __init__ shapes)
# ---------------------------------------------------------------------------

def init_params(key, num_edge, num_channels, w_in, w_out, num_class, num_layers):
    k_w, k_l1w, k_l1b, k_l2w, k_l2b = jax.random.split(key, 5)

    layer_weights = []
    for i in range(num_layers):
        lw = {"w1": jnp.full((num_channels, num_edge), 0.1, jnp.float32)}  # GTConv const init
        if i == 0:
            lw["w2"] = jnp.full((num_channels, num_edge), 0.1, jnp.float32)
        layer_weights.append(lw)

    # xavier_uniform_ on (w_in, w_out)
    bound = math.sqrt(6.0 / (w_in + w_out))
    weight = jax.random.uniform(k_w, (w_in, w_out), jnp.float32, -bound, bound)

    fan1 = w_out * num_channels
    b1 = 1.0 / math.sqrt(fan1)
    lin1_w = jax.random.uniform(k_l1w, (w_out, fan1), jnp.float32, -b1, b1)  # (out, in)
    lin1_b = jax.random.uniform(k_l1b, (w_out,), jnp.float32, -b1, b1)

    b2 = 1.0 / math.sqrt(w_out)
    lin2_w = jax.random.uniform(k_l2w, (num_class, w_out), jnp.float32, -b2, b2)
    lin2_b = jax.random.uniform(k_l2b, (num_class,), jnp.float32, -b2, b2)

    return {
        "layer_weights": layer_weights,
        "weight": weight,            # GTN.weight (w_in, w_out); GTN.bias unused in forward
        "lin1_w": lin1_w, "lin1_b": lin1_b,
        "lin2_w": lin2_w, "lin2_b": lin2_b,
    }


# ---------------------------------------------------------------------------
# GTN forward (glue around the fused Pallas kernels)
# ---------------------------------------------------------------------------

def gtn_forward(params, A_nne, X, target_x, target):
    # (N, N, E) -> (E, N, N)   (matches A.unsqueeze(0).permute(0,3,1,2), batch dropped)
    A = jnp.transpose(A_nne, (2, 0, 1)).astype(jnp.float32)
    X = X.astype(jnp.float32)

    Ws = []
    H = None
    for i, lw in enumerate(params["layer_weights"]):
        w1s = jax.nn.softmax(lw["w1"], axis=1)          # softmax over edge types
        if i == 0:
            w2s = jax.nn.softmax(lw["w2"], axis=1)
            H = gt_layer_first(A, w1s, w2s)             # conv1+conv2+bmm fused
            Ws.append([w1s[:, :, None, None], w2s[:, :, None, None]])
        else:
            H = gt_layer_next(A, H, w1s)                # norm+conv1+bmm fused
            Ws.append([w1s[:, :, None, None]])

    # Fused: XW, per-channel gcn_conv + ReLU, concat, linear1 + ReLU.
    X1 = gcn_linear1(H, X, params["weight"], params["lin1_w"].T,
                     params["lin1_b"][None, :])          # (N, w_out)

    # Tiny tail: target gather + linear2 + cross-entropy in plain JAX.
    y = X1[target_x] @ params["lin2_w"].T + params["lin2_b"][None, :]
    logz = jax.nn.logsumexp(y, axis=1)
    picked = jnp.take_along_axis(y, target[:, None], axis=1)[:, 0]
    loss = jnp.mean(logz - picked)
    return loss, y, Ws


# ---------------------------------------------------------------------------
# Main
# ---------------------------------------------------------------------------

if __name__ == "__main__":
    # Small shapes consistent with the module.
    num_edge, num_channels = 4, 2
    n_nodes, w_in, w_out = 16, 8, 16
    num_class, num_layers = 3, 2

    key = jax.random.PRNGKey(0)
    k_a, k_x, k_p = jax.random.split(key, 3)

    # A in the PyTorch-facing layout (N, N, num_edge); non-negative adjacency values.
    A = jax.random.uniform(k_a, (n_nodes, n_nodes, num_edge), jnp.float32)
    X = jax.random.normal(k_x, (n_nodes, w_in), jnp.float32)
    target_x = jnp.array([0, 3, 7, 11], dtype=jnp.int32)
    target = jnp.array([0, 1, 2, 1], dtype=jnp.int32)

    params = init_params(k_p, num_edge, num_channels, w_in, w_out, num_class, num_layers)

    loss, y, Ws = gtn_forward(params, A, X, target_x, target)
    jax.block_until_ready((loss, y))
    print("KERNEL_OK")
</pallas_src>

<mosaic_0001>
module attributes {stable_mosaic.version = 11 : i64} {
  func.func @layer_first_kernel(%arg0: i32, %arg1: memref<2x4xf32, #tpu.memory_space<smem>>, %arg2: memref<2x4xf32, #tpu.memory_space<smem>>, %arg3: memref<4x16x16xf32, #tpu.memory_space<vmem>>, %arg4: memref<1x16x16xf32, #tpu.memory_space<vmem>>) attributes {dimension_semantics = [#tpu.dimension_semantics<parallel>], iteration_bounds = array<i64: 2>, scalar_prefetch = 0 : i64, scratch_operands = 0 : i64, tpu.core_type = #tpu.core_type<tc>, window_params = [{transform_indices = @transform_0, window_bounds = array<i64: 2, 4>}, {transform_indices = @transform_1, window_bounds = array<i64: 2, 4>}, {pipeline_mode = #tpu.pipeline_mode<synchronous>, transform_indices = @transform_2, window_bounds = array<i64: 4, 16, 16>}, {transform_indices = @transform_3, window_bounds = array<i64: 1, 16, 16>}]} {
    %0 = arith.index_cast %arg0 : i32 to index
    %c0 = arith.constant 0 : index
    %1 = memref.load %arg1[%0, %c0] : memref<2x4xf32, #tpu.memory_space<smem>>
    %c0_0 = arith.constant 0 : index
    %c0_1 = arith.constant 0 : index
    %c0_2 = arith.constant 0 : index
    %2 = vector.load %arg3[%c0_0, %c0_1, %c0_2] : memref<4x16x16xf32, #tpu.memory_space<vmem>>, vector<1x16x16xf32>
    %3 = vector.shape_cast %2 : vector<1x16x16xf32> to vector<16x16xf32>
    %4 = vector.broadcast %1 : f32 to vector<16x16xf32>
    %5 = arith.mulf %4, %3 : vector<16x16xf32>
    %6 = arith.index_cast %arg0 : i32 to index
    %c1 = arith.constant 1 : index
    %7 = memref.load %arg1[%6, %c1] : memref<2x4xf32, #tpu.memory_space<smem>>
    %c1_3 = arith.constant 1 : index
    %c0_4 = arith.constant 0 : index
    %c0_5 = arith.constant 0 : index
    %8 = vector.load %arg3[%c1_3, %c0_4, %c0_5] : memref<4x16x16xf32, #tpu.memory_space<vmem>>, vector<1x16x16xf32>
    %9 = vector.shape_cast %8 : vector<1x16x16xf32> to vector<16x16xf32>
    %10 = vector.broadcast %7 : f32 to vector<16x16xf32>
    %11 = arith.mulf %10, %9 : vector<16x16xf32>
    %12 = arith.addf %5, %11 : vector<16x16xf32>
    %13 = arith.index_cast %arg0 : i32 to index
    %c2 = arith.constant 2 : index
    %14 = memref.load %arg1[%13, %c2] : memref<2x4xf32, #tpu.memory_space<smem>>
    %c2_6 = arith.constant 2 : index
    %c0_7 = arith.constant 0 : index
    %c0_8 = arith.constant 0 : index
    %15 = vector.load %arg3[%c2_6, %c0_7, %c0_8] : memref<4x16x16xf32, #tpu.memory_space<vmem>>, vector<1x16x16xf32>
    %16 = vector.shape_cast %15 : vector<1x16x16xf32> to vector<16x16xf32>
    %17 = vector.broadcast %14 : f32 to vector<16x16xf32>
    %18 = arith.mulf %17, %16 : vector<16x16xf32>
    %19 = arith.addf %12, %18 : vector<16x16xf32>
    %20 = arith.index_cast %arg0 : i32 to index
    %c3 = arith.constant 3 : index
    %21 = memref.load %arg1[%20, %c3] : memref<2x4xf32, #tpu.memory_space<smem>>
    %c3_9 = arith.constant 3 : index
    %c0_10 = arith.constant 0 : index
    %c0_11 = arith.constant 0 : index
    %22 = vector.load %arg3[%c3_9, %c0_10, %c0_11] : memref<4x16x16xf32, #tpu.memory_space<vmem>>, vector<1x16x16xf32>
    %23 = vector.shape_cast %22 : vector<1x16x16xf32> to vector<16x16xf32>
    %24 = vector.broadcast %21 : f32 to vector<16x16xf32>
    %25 = arith.mulf %24, %23 : vector<16x16xf32>
    %26 = arith.addf %19, %25 : vector<16x16xf32>
    %27 = arith.index_cast %arg0 : i32 to index
    %c0_12 = arith.constant 0 : index
    %28 = memref.load %arg2[%27, %c0_12] : memref<2x4xf32, #tpu.memory_space<smem>>
    %c0_13 = arith.constant 0 : index
    %c0_14 = arith.constant 0 : index
    %c0_15 = arith.constant 0 : index
    %29 = vector.load %arg3[%c0_13, %c0_14, %c0_15] : memref<4x16x16xf32, #tpu.memory_space<vmem>>, vector<1x16x16xf32>
    %30 = vector.shape_cast %29 : vector<1x16x16xf32> to vector<16x16xf32>
    %31 = vector.broadcast %28 : f32 to vector<16x16xf32>
    %32 = arith.mulf %31, %30 : vector<16x16xf32>
    %33 = arith.index_cast %arg0 : i32 to index
    %c1_16 = arith.constant 1 : index
    %34 = memref.load %arg2[%33, %c1_16] : memref<2x4xf32, #tpu.memory_space<smem>>
    %c1_17 = arith.constant 1 : index
    %c0_18 = arith.constant 0 : index
    %c0_19 = arith.constant 0 : index
    %35 = vector.load %arg3[%c1_17, %c0_18, %c0_19] : memref<4x16x16xf32, #tpu.memory_space<vmem>>, vector<1x16x16xf32>
    %36 = vector.shape_cast %35 : vector<1x16x16xf32> to vector<16x16xf32>
    %37 = vector.broadcast %34 : f32 to vector<16x16xf32>
    %38 = arith.mulf %37, %36 : vector<16x16xf32>
    %39 = arith.addf %32, %38 : vector<16x16xf32>
    %40 = arith.index_cast %arg0 : i32 to index
    %c2_20 = arith.constant 2 : index
    %41 = memref.load %arg2[%40, %c2_20] : memref<2x4xf32, #tpu.memory_space<smem>>
    %c2_21 = arith.constant 2 : index
    %c0_22 = arith.constant 0 : index
    %c0_23 = arith.constant 0 : index
    %42 = vector.load %arg3[%c2_21, %c0_22, %c0_23] : memref<4x16x16xf32, #tpu.memory_space<vmem>>, vector<1x16x16xf32>
    %43 = vector.shape_cast %42 : vector<1x16x16xf32> to vector<16x16xf32>
    %44 = vector.broadcast %41 : f32 to vector<16x16xf32>
    %45 = arith.mulf %44, %43 : vector<16x16xf32>
    %46 = arith.addf %39, %45 : vector<16x16xf32>
    %47 = arith.index_cast %arg0 : i32 to index
    %c3_24 = arith.constant 3 : index
    %48 = memref.load %arg2[%47, %c3_24] : memref<2x4xf32, #tpu.memory_space<smem>>
    %c3_25 = arith.constant 3 : index
    %c0_26 = arith.constant 0 : index
    %c0_27 = arith.constant 0 : index
    %49 = vector.load %arg3[%c3_25, %c0_26, %c0_27] : memref<4x16x16xf32, #tpu.memory_space<vmem>>, vector<1x16x16xf32>
    %50 = vector.shape_cast %49 : vector<1x16x16xf32> to vector<16x16xf32>
    %51 = vector.broadcast %48 : f32 to vector<16x16xf32>
    %52 = arith.mulf %51, %50 : vector<16x16xf32>
    %53 = arith.addf %46, %52 : vector<16x16xf32>
    %cst = arith.constant dense<0.000000e+00> : vector<16x16xf32>
    %54 = tpu.matmul %26, %53, %cst {dimension_numbers = #tpu.dot_dimension_numbers<[1], [0], [0], [1], [0, 0, 1, 1], [], []>} : vector<16x16xf32>, vector<16x16xf32>, vector<16x16xf32> -> vector<16x16xf32>
    %c0_28 = arith.constant 0 : index
    %c0_29 = arith.constant 0 : index
    %c0_30 = arith.constant 0 : index
    %55 = vector.load %arg4[%c0_28, %c0_29, %c0_30] : memref<1x16x16xf32, #tpu.memory_space<vmem>>, vector<1x16x16xf32>
    %56 = vector.shape_cast %55 : vector<1x16x16xf32> to vector<16x16xf32>
    %57 = vector.shape_cast %54 : vector<16x16xf32> to vector<1x16x16xf32>
    tpu.vector_store %arg4[%c0_28, %c0_29, %c0_30], %57 {strides = array<i32>} : memref<1x16x16xf32, #tpu.memory_space<vmem>>, vector<1x16x16xf32>,
    return
  }
  func.func @transform_0(%arg0: i32) -> (i32, i32) {
    %c0_i32 = arith.constant 0 : i32
    %c0_i32_0 = arith.constant 0 : i32
    %c0_i32_1 = arith.constant 0 : i32
    return %c0_i32, %c0_i32_0 : i32, i32
  }
  func.func @transform_1(%arg0: i32) -> (i32, i32) {
    %c0_i32 = arith.constant 0 : i32
    %c0_i32_0 = arith.constant 0 : i32
    %c0_i32_1 = arith.constant 0 : i32
    return %c0_i32, %c0_i32_0 : i32, i32
  }
  func.func @transform_2(%arg0: i32) -> (i32, i32, i32) {
    %c0_i32 = arith.constant 0 : i32
    %c0_i32_0 = arith.constant 0 : i32
    %c0_i32_1 = arith.constant 0 : i32
    %c0_i32_2 = arith.constant 0 : i32
    return %c0_i32, %c0_i32_0, %c0_i32_1 : i32, i32, i32
  }
  func.func @transform_3(%arg0: i32) -> (i32, i32, i32) {
    %c0_i32 = arith.constant 0 : i32
    %c0_i32_0 = arith.constant 0 : i32
    %c0_i32_1 = arith.constant 0 : i32
    return %arg0, %c0_i32, %c0_i32_0 : i32, i32, i32
  }
}

</mosaic_0001>

<llo_original>
// kernel: tpu_custom_call.1
$region0: #{tpu_custom_call.1}
  #allocation0 [shape = 'u32[]', space=smem, size = 0x4, offset = 0x4, fixed_abs, tag = 'smem constant byte address 0x4 - core index']
  #allocation1 [shape = 'u32[144,128]{1,0:T(1,128)}', space=vmem, size = 0x12000, scoped, tag = 'internal scratch']
  %s0 = inlined_call_operand.hbm [shape: f32[2,4], index: 0, kind: input, shape index: {}]
  %s1 = inlined_call_operand.vmem [shape: f32[2,4], index: 1, kind: input, shape index: {}]
  %s2 = inlined_call_operand.hbm [shape: f32[4,16,16], index: 2, kind: input, shape index: {}]
  %s3 = inlined_call_operand.hbm [shape: f32[2,16,16], index: 3, kind: output, shape index: {}]
  %s4 = sld [smem:[#allocation0]]
  $region57: #{tpu_custom_call.1} parent=0
    _
  %s6 = ssub.s32 1, %s4
  %s7 = scalar_select 0, %s6, %s4
  $region1: #{tpu_custom_call.1} parent=0
    #allocation2 [shape = 'u8[1024]{0}', space=smem, size = 0x400, scoped, tag = 'input window, operand 0, single buffered']
    #allocation3 [shape = 's32[2]{0}', space=sflag, size = 0x8, scoped, tag = 'scoped memory for tpu_custom_call.1']
    #allocation4 [shape = 's32[2]{0}', space=sflag, size = 0x8, scoped, tag = 'scoped memory for tpu_custom_call.1']
    #allocation5 [shape = 's32[2]{0}', space=sflag, size = 0x8, scoped, tag = 'scoped memory for tpu_custom_call.1']
    #allocation6 [shape = 's32[2]{0}', space=sflag, size = 0x8, scoped, tag = 'scoped memory for tpu_custom_call.1']
    #allocation7 [shape = 'u8[1024]{0}', space=smem, size = 0x400, scoped, tag = 'input window, operand 1, single buffered']
    #allocation8 [shape = 'u8[32768]{0}', space=vmem, size = 0x8000, scoped, tag = 'input window, operand 2, single buffered']
    #allocation9 [shape = 'u8[16384]{0}', space=vmem, size = 0x4000, scoped, tag = 'output window, operand 0']
    %8 = vsyncpa [#allocation5], 0
    %9 = vsyncpa [#allocation6], 0
    %10 = vsyncpa [#allocation3], 0
    %11 = vsyncpa [#allocation4], 0
    %s12 = scalar_lea.sflag [#allocation4], 1
    %13 = vsyncpa %s12, 0
    loop: start=0, step=1, limit=4
    $region2: #{tpu_custom_call.1} parent=1 // loop_pre_header
      _
    $region3: #{tpu_custom_call.1} parent=1 // loop_header
      %s15 = sphi 0, %s19
      %p16 = scmp.ge.s32.totalorder %s15, 4
      %s23 = sphi 0, %s23
      %s25 = sphi 0, %s23
      %s26 = sphi 0, %s25
      %s40 = sphi 0, %s26
      %s44 = sphi 0, %s44
      %s46 = sphi 0, %s44
      %s47 = sphi 0, %s46
      %s61 = sphi 0, %s47
      %s65 = sphi 0, %s65
      %s67 = sphi 0, %s65
      %s68 = sphi 0, %s67
      %s82 = sphi 0, %s68
      %s88 = sphi 0, %s90
      %s91 = sphi 0, %s88
      %s92 = sphi 0, %s91
      %s108 = sphi 0, %s92
    $region4: #{tpu_custom_call.1} parent=1 // loop_header_branch
      %18 = sbr.rel (%p16) target = $region8
    $region5: #{tpu_custom_call.1} parent=1 // loop_body
      %s20 = ssub.s32 %s15, 1
      %s21 = ssub.s32 %s15, 2
      %s22 = sadd.s32 %s15, 1
      %s24 = sadd.s32 %s23, 1
      %p27 = scmp.eq.s32.totalorder %s15, 1
      %p28 = scmp.ne.s32.totalorder %s23, %s25
      %p29 = scmp.eq.s32.totalorder %s15, 0
      %p30 = por %p28, %p29
      %p31 = scmp.ne.s32.totalorder %s23, %s25
      %p32 = scmp.eq.s32.totalorder %s20, 1
      %p33 = por %p31, %p32
      %p34 = scmp.ne.s32.totalorder %s25, %s26
      %p35 = scmp.eq.s32.totalorder %s20, 0
      %p36 = por %p34, %p35
      %p37 = scmp.ne.s32.totalorder %s25, %s26
      %p38 = scmp.eq.s32.totalorder %s21, 1
      %p39 = por %p37, %p38
      %p41 = scmp.ne.s32.totalorder %s26, %s40
      %p42 = scmp.eq.s32.totalorder %s21, 0
      %p43 = por %p41, %p42
      %s45 = sadd.s32 %s44, 1
      %p48 = scmp.eq.s32.totalorder %s15, 1
      %p49 = scmp.ne.s32.totalorder %s44, %s46
      %p50 = scmp.eq.s32.totalorder %s15, 0
      %p51 = por %p49, %p50
      %p52 = scmp.ne.s32.totalorder %s44, %s46
      %p53 = scmp.eq.s32.totalorder %s20, 1
      %p54 = por %p52, %p53
      %p55 = scmp.ne.s32.totalorder %s46, %s47
      %p56 = scmp.eq.s32.totalorder %s20, 0
      %p57 = por %p55, %p56
      %p58 = scmp.ne.s32.totalorder %s46, %s47
      %p59 = scmp.eq.s32.totalorder %s21, 1
      %p60 = por %p58, %p59
      %p62 = scmp.ne.s32.totalorder %s47, %s61
      %p63 = scmp.eq.s32.totalorder %s21, 0
      %p64 = por %p62, %p63
      %s66 = sadd.s32 %s65, 1
      %p69 = scmp.eq.s32.totalorder %s15, 1
      %p70 = scmp.ne.s32.totalorder %s65, %s67
      %p71 = scmp.eq.s32.totalorder %s15, 0
      %p72 = por %p70, %p71
      %p73 = scmp.ne.s32.totalorder %s65, %s67
      %p74 = scmp.eq.s32.totalorder %s20, 1
      %p75 = por %p73, %p74
      %p76 = scmp.ne.s32.totalorder %s67, %s68
      %p77 = scmp.eq.s32.totalorder %s20, 0
      %p78 = por %p76, %p77
      %p79 = scmp.ne.s32.totalorder %s67, %s68
      %p80 = scmp.eq.s32.totalorder %s21, 1
      %p81 = por %p79, %p80
      %p83 = scmp.ne.s32.totalorder %s68, %s82
      %p84 = scmp.eq.s32.totalorder %s21, 0
      %p85 = por %p83, %p84
      %s86 = ssub.s32 %s15, %s22
      %p87 = scmp.eq.s32.totalorder %s86, 0
      %s89 = sadd.s32 %s88, 1
      %s90 = scalar_select %p87, %s88, %s89
      %p93 = pneg %p87
      %p94 = scmp.eq.s32.totalorder %s15, 1
      %p95 = por %p93, %p94
      %p96 = scmp.ne.s32.totalorder %s88, %s91
      %p97 = scmp.eq.s32.totalorder %s15, 0
      %p98 = por %p96, %p97
      %p99 = scmp.ne.s32.totalorder %s88, %s91
      %p100 = scmp.eq.s32.totalorder %s20, 1
      %p101 = por %p99, %p100
      %p102 = scmp.ne.s32.totalorder %s91, %s92
      %p103 = scmp.eq.s32.totalorder %s20, 0
      %p104 = por %p102, %p103
      %p105 = scmp.ne.s32.totalorder %s91, %s92
      %p106 = scmp.eq.s32.totalorder %s21, 1
      %p107 = por %p105, %p106
      %p109 = scmp.ne.s32.totalorder %s92, %s108
      %p110 = scmp.eq.s32.totalorder %s21, 0
      %p111 = por %p109, %p110
      %p112 = scmp.le.s32.totalorder 1, %s15
      %p113 = scmp.lt.s32.totalorder %s15, 3
      %p114 = pnand %p112, %p113
      %p115 = pneg %p114
      // Predicated region
      $region9: #{tpu_custom_call.1} parent=5 // pred_check
        _
      $region10: #{tpu_custom_call.1} parent=5 // pred_check_branch
        %117 = sbr.rel (%p114) target = $region12
      $region11: #{tpu_custom_call.1} parent=5 // pred_region
        %s118 = ssub.s32 %s15, 1
        // Predicated region
        $region13: #{tpu_custom_call.1} parent=11 // pred_check
          %p119 = pneg %p36
        $region14: #{tpu_custom_call.1} parent=11 // pred_check_branch
          %121 = sbr.rel (%p119) target = $region16
        $region15: #{tpu_custom_call.1} parent=11 // pred_region
          %s123 = ssub.s32 32, 32
          %124 = vsyncadd [#allocation5], %s123
          %127 = dma.hbm_to_smem %s0, 32, [#allocation2], [#allocation5]
        $region16: #{tpu_custom_call.1} parent=11 // pred_fallthru
          _
        // Predicated region
        $region17: #{tpu_custom_call.1} parent=11 // pred_check
          %p128 = pneg %p57
        $region18: #{tpu_custom_call.1} parent=11 // pred_check_branch
          %130 = sbr.rel (%p128) target = $region20
        $region19: #{tpu_custom_call.1} parent=11 // pred_region
          %s132 = ssub.s32 32, 32
          %133 = vsyncadd [#allocation6], %s132
          %s135 = sshll.u32 %s1, 4
          %s136 = int_to_ptr.vmem [resolvable:$true] %s135
          %138 = dma.vmem_to_smem %s136, 32, [#allocation7], [#allocation6]
        $region20: #{tpu_custom_call.1} parent=11 // pred_fallthru
          _
        // Predicated region
        $region21: #{tpu_custom_call.1} parent=11 // pred_check
          %p139 = pneg %p78
        $region22: #{tpu_custom_call.1} parent=11 // pred_check_branch
          %141 = sbr.rel (%p139) target = $region24
        $region23: #{tpu_custom_call.1} parent=11 // pred_region
          %s143 = ssub.s32 1024, 1024
          %144 = vsyncadd [#allocation3], %s143
          %s145 = sshll.u32 [#allocation8], 4
          %s146 = int_to_ptr.vmem [resolvable:$true] %s145
          %151 = dma.hbm_to_vmem [thread:$0]  %s2, 1024, %s146, [#allocation3], 128, 128, 8
        $region24: #{tpu_custom_call.1} parent=11 // pred_fallthru
          _
      $region12: #{tpu_custom_call.1} parent=5 // pred_fallthru
        _
      %p152 = scmp.lt.s32.totalorder %s15, 2
      // Predicated region
      $region25: #{tpu_custom_call.1} parent=5 // pred_check
        %p153 = pneg %p152
      $region26: #{tpu_custom_call.1} parent=5 // pred_check_branch
        %155 = sbr.rel (%p153) target = $region28
      $region27: #{tpu_custom_call.1} parent=5 // pred_region
        _
      $region28: #{tpu_custom_call.1} parent=5 // pred_fallthru
        _
      %p156 = scmp.le.s32.totalorder 1, %s15
      %p157 = scmp.lt.s32.totalorder %s15, 3
      %p158 = pnand %p156, %p157
      %p159 = pneg %p158
      // Predicated region
      $region29: #{tpu_custom_call.1} parent=5 // pred_check
        _
      $region30: #{tpu_custom_call.1} parent=5 // pred_check_branch
        %161 = sbr.rel (%p158) target = $region32
      $region31: #{tpu_custom_call.1} parent=5 // pred_region
        %s162 = ssub.s32 %s15, 1
        // Predicated region
        $region33: #{tpu_custom_call.1} parent=31 // pred_check
          %p163 = pneg %p36
        $region34: #{tpu_custom_call.1} parent=31 // pred_check_branch
          %165 = sbr.rel (%p163) target = $region36
        $region35: #{tpu_custom_call.1} parent=31 // pred_region
          %166 = dma.done [#allocation5], 32
        $region36: #{tpu_custom_call.1} parent=31 // pred_fallthru
          _
        // Predicated region
        $region37: #{tpu_custom_call.1} parent=31 // pred_check
          %p167 = pneg %p57
        $region38: #{tpu_custom_call.1} parent=31 // pred_check_branch
          %169 = sbr.rel (%p167) target = $region40
        $region39: #{tpu_custom_call.1} parent=31 // pred_region
          %170 = dma.done [#allocation6], 32
        $region40: #{tpu_custom_call.1} parent=31 // pred_fallthru
          _
        // Predicated region
        $region41: #{tpu_custom_call.1} parent=31 // pred_check
          %p171 = pneg %p78
        $region42: #{tpu_custom_call.1} parent=31 // pred_check_branch
          %173 = sbr.rel (%p171) target = $region44
        $region43: #{tpu_custom_call.1} parent=31 // pred_region
          %174 = dma.done [#allocation3], 1024
        $region44: #{tpu_custom_call.1} parent=31 // pred_fallthru
          _
        %175 = sfence
        %p176 = pneg %p36
        %p177 = pneg %p33
        %p178 = pneg %p57
        %p179 = pneg %p54
        %p180 = pneg %p78
        %p181 = pneg %p75
        %p182 = pneg %p104
        %p183 = pneg %p101
        %s184 = sand.u32 %s91, 1
        %s185 = scalar_lea.sflag [#allocation4], %s184
        %s186 = sand.u32 %s91, 1
        %s187 = smul.addr %s186, 16
        %s188 = scalar_lea.vmem [#allocation9], %s187
        %s189 = smul.u32 %s20, 128
        %s190 = sld [smem:[#allocation2 + %s189]]
        %v191 = vld [vmem:[#allocation8] sm:$0xff]
        %v192 = vld [vmem:[#allocation8 + $0x8] sm:$0xff]
        %v193 = vstv %s190
        %v194 = vmul.f32 %v193, %v191
        %v195 = vmul.f32 %v193, %v192
        %s196 = sadd.s32 %s189, 1
        %s197 = sld [smem:[#allocation2 + %s196]]
        %s198 = scalar_lea.vmem [#allocation8], 16
        %v199 = vld [vmem:[%s198] sm:$0xff]
        %v200 = vld [vmem:[%s198 + $0x8] sm:$0xff]
        %v201 = vstv %s197
        %v202 = vmul.f32 %v201, %v199
        %v203 = vmul.f32 %v201, %v200
        %v204 = vadd.f32 %v194, %v202
        %v205 = vadd.f32 %v195, %v203
        %s206 = sadd.s32 %s189, 2
        %s207 = sld [smem:[#allocation2 + %s206]]
        %s208 = scalar_lea.vmem [#allocation8], 32
        %v209 = vld [vmem:[%s208] sm:$0xff]
        %v210 = vld [vmem:[%s208 + $0x8] sm:$0xff]
        %v211 = vstv %s207
        %v212 = vmul.f32 %v211, %v209
        %v213 = vmul.f32 %v211, %v210
        %v214 = vadd.f32 %v204, %v212
        %v215 = vadd.f32 %v205, %v213
        %s216 = sadd.s32 %s189, 3
        %s217 = sld [smem:[#allocation2 + %s216]]
        %s218 = scalar_lea.vmem [#allocation8], 48
        %v219 = vld [vmem:[%s218] sm:$0xff]
        %v220 = vld [vmem:[%s218 + $0x8] sm:$0xff]
        %v221 = vstv %s217
        %v222 = vmul.f32 %v221, %v219
        %v223 = vmul.f32 %v221, %v220
        %v224 = vadd.f32 %v214, %v222
        %v225 = vadd.f32 %v215, %v223
        %s226 = sld [smem:[#allocation7 + %s189]]
        %v227 = vstv %s226
        %v228 = vmul.f32 %v227, %v191
        %v229 = vmul.f32 %v227, %v192
        %s230 = sld [smem:[#allocation7 + %s196]]
        %v231 = vstv %s230
        %v232 = vmul.f32 %v231, %v199
        %v233 = vmul.f32 %v231, %v200
        %v234 = vadd.f32 %v228, %v232
        %v235 = vadd.f32 %v229, %v233
        %s236 = sld [smem:[#allocation7 + %s206]]
        %v237 = vstv %s236
        %v238 = vmul.f32 %v237, %v209
        %v239 = vmul.f32 %v237, %v210
        %v240 = vadd.f32 %v234, %v238
        %v241 = vadd.f32 %v235, %v239
        %s242 = sld [smem:[#allocation7 + %s216]]
        %v243 = vstv %s242
        %v244 = vmul.f32 %v243, %v219
        %v245 = vmul.f32 %v243, %v220
        %v246 = vadd.f32 %v240, %v244
        %v247 = vadd.f32 %v241, %v245
        %vm248 = vcmask 130048
        %v250 = vsel %vm248, %v224, 0
        %v253 = vsel %vm248, %v225, 0
        %255 = vmatprep.subr.mxu0 0.0
        %256 = vmatpush1.msra.mxu0 %v246
        %257 = vmatprep.subr.mxu0 0.0
        %258 = vmatpush1.msra.mxu0 %v247
        %259 = vmatprep.subr.mxu0 0.0
        %260 = vmatpush1.msra.mxu0 0.0
        %261 = vmatprep.subr.mxu0 0.0
        %262 = vmatpush1.msra.mxu0 0.0
        %263 = vmatprep.subr.mxu0 0.0
        %264 = vmatpush1.msra.mxu0 0.0
        %265 = vmatprep.subr.mxu0 0.0
        %266 = vmatpush1.msra.mxu0 0.0
        %267 = vmatprep.subr.mxu0 0.0
        %268 = vmatpush1.msra.mxu0 0.0
        %269 = vmatprep.subr.mxu0 0.0
        %270 = vmatpush1.msra.mxu0 0.0
        %271 = vmatprep.subr.mxu0 0.0
        %272 = vmatpush1.msra.mxu0 0.0
        %273 = vmatprep.subr.mxu0 0.0
        %274 = vmatpush1.msra.mxu0 0.0
        %275 = vmatprep.subr.mxu0 0.0
        %276 = vmatpush1.msra.mxu0 0.0
        %277 = vmatprep.subr.mxu0 0.0
        %278 = vmatpush1.msra.mxu0 0.0
        %279 = vmatprep.subr.mxu0 0.0
        %280 = vmatpush1.msra.mxu0 0.0
        %281 = vmatprep.subr.mxu0 0.0
        %282 = vmatpush1.msra.mxu0 0.0
        %283 = vmatprep.subr.mxu0 0.0
        %284 = vmatpush1.msra.mxu0 0.0
        %285 = vmatprep.subr.mxu0 0.0
        %286 = vmatpush1.msra.mxu0 0.0
        %287 = vmatprep.subr.mxu0 0.0
        %288 = vmatpush1.msra.mxu0 0.0
        %289 = vmatprep.subr.mxu0 0.0
        %290 = vmatpush1.msra.mxu0 0.0
        %291 = vmatprep.subr.mxu0 0.0
        %292 = vmatpush1.msra.mxu0 0.0
        %293 = vmatprep.subr.mxu0 0.0
        %294 = vmatpush1.msra.mxu0 0.0
        %295 = vmatprep.subr.mxu0 0.0
        %296 = vmatpush1.msra.mxu0 0.0
        %297 = vmatprep.subr.mxu0 0.0
        %298 = vmatpush1.msra.mxu0 0.0
        %299 = vmatprep.subr.mxu0 0.0
        %300 = vmatpush1.msra.mxu0 0.0
        %301 = vmatprep.subr.mxu0 0.0
        %302 = vmatpush1.msra.mxu0 0.0
        %303 = vmatprep.subr.mxu0 0.0
        %304 = vmatpush1.msra.mxu0 0.0
        %305 = vmatprep.subr.mxu0 0.0
        %306 = vmatpush1.msra.mxu0 0.0
        %307 = vmatprep.subr.mxu0 0.0
        %308 = vmatpush1.msra.mxu0 0.0
        %309 = vmatprep.subr.mxu0 0.0
        %310 = vmatpush1.msra.mxu0 0.0
        %311 = vmatprep.subr.mxu0 0.0
        %312 = vmatpush1.msra.mxu0 0.0
        %313 = vmatprep.subr.mxu0 0.0
        %314 = vmatpush1.msra.mxu0 0.0
        %315 = vmatprep.subr.mxu0 0.0
        %316 = vmatpush1.msra.mxu0 0.0
        %317 = vmatprep.subr.mxu0 0.0
        %318 = vmatpush1.msra.mxu0 0.0
        %319 = vmatprep.mubr.f32.mxu0 0.0
        %320 = vmatmul.mubr.f32.gmra.mrb[0].mxu0 %v250
        %v321 = vpop.f32.mrb[0].mxu0
        %v322 = vadd.f32 0.0, %v321
        %v323 = vpop.f32.mrb[0].mxu0
        %324 = vmatprep.mubr.f32.mxu0 0.0
        %325 = vmatmul.mubr.f32.gmra.mrb[0].mxu0 %v253
        %v326 = vpop.f32.mrb[0].mxu0
        %v327 = vadd.f32 0.0, %v326
        %v328 = vpop.f32.mrb[0].mxu0
        %329 = vdwg.mxu0
        %330 = vst.msk [vmem:[%s188] sm:$0xff] %vm248, %v322
        %331 = vst.msk [vmem:[%s188 + $0x8] sm:$0xff] %vm248, %v327
        %s332 = sand.u32 %s91, 1
        %s333 = scalar_lea.sflag [#allocation4], %s332
        %s334 = sand.u32 %s91, 1
        %s335 = smul.addr %s334, 16
        %s336 = scalar_lea.vmem [#allocation9], %s335
        // Predicated region
        $region45: #{tpu_custom_call.1} parent=31 // pred_check
          %p337 = pneg %p101
        $region46: #{tpu_custom_call.1} parent=31 // pred_check_branch
          %339 = sbr.rel (%p337) target = $region48
        $region47: #{tpu_custom_call.1} parent=31 // pred_region
          %s341 = ssub.s32 256, 256
          %342 = vsyncadd %s333, %s341
          %s343 = smul.addr %s20, 2
          %s344 = smul.addr %s343, 128
          %s345 = scalar_lea.hbm %s3, %s344
          %s346 = sshll.u32 %s336, 4
          %s347 = int_to_ptr.vmem [resolvable:$true] %s346
          %352 = dma.vmem_to_hbm [thread:$0]  %s347, 256, %s345, %s333, 128, 128, 8
        $region48: #{tpu_custom_call.1} parent=31 // pred_fallthru
          _
      $region32: #{tpu_custom_call.1} parent=5 // pred_fallthru
        _
      %p353 = scmp.le.s32.totalorder 2, %s15
      // Predicated region
      $region49: #{tpu_custom_call.1} parent=5 // pred_check
        %p354 = pneg %p353
      $region50: #{tpu_custom_call.1} parent=5 // pred_check_branch
        %356 = sbr.rel (%p354) target = $region52
      $region51: #{tpu_custom_call.1} parent=5 // pred_region
        %s357 = ssub.s32 %s15, 2
        // Predicated region
        $region53: #{tpu_custom_call.1} parent=51 // pred_check
          %p358 = pneg %p107
        $region54: #{tpu_custom_call.1} parent=51 // pred_check_branch
          %360 = sbr.rel (%p358) target = $region56
        $region55: #{tpu_custom_call.1} parent=51 // pred_region
          %s361 = sand.u32 %s92, 1
          %s362 = scalar_lea.sflag [#allocation4], %s361
          %s363 = sand.u32 %s92, 1
          %s364 = smul.addr %s363, 16
          %s365 = scalar_lea.vmem [#allocation9], %s364
          %366 = dma.done %s362, 256
        $region56: #{tpu_custom_call.1} parent=51 // pred_fallthru
          _
      $region52: #{tpu_custom_call.1} parent=5 // pred_fallthru
        _
    $region6: #{tpu_custom_call.1} parent=1 // loop_footer
      %s19 = sadd.s32 1, %s15
    $region7: #{tpu_custom_call.1} parent=1 // loop_footer_branch
      %14 = sbr.rel target = $region3
    $region8: #{tpu_custom_call.1} parent=1 // loop_exit
      _
    %367 = vsyncpa [#allocation3], 1
    %s368 = scalar_lea.sflag [#allocation3], 1
    %369 = vsyncpa %s368, 1
    %370 = vsyncpa [#allocation4], 1
    %s371 = scalar_lea.sflag [#allocation4], 1
    %372 = vsyncpa %s371, 1
    %373 = vsyncpa [#allocation5], 1
    %s374 = scalar_lea.sflag [#allocation5], 1
    %375 = vsyncpa %s374, 1
    %376 = vsyncpa [#allocation6], 1
    %s377 = scalar_lea.sflag [#allocation6], 1
    %378 = vsyncpa %s377, 1

</llo_original>
